<compile_context>
chip_gen: v7x
topology: tpu7x:2x2x1
jax: 0.10.0
libtpu: 0.0.40
codegen_flags: <defaults>
</compile_context>

<pallas_src>
import functools
import math

import numpy as np
import jax
import jax.numpy as jnp
from jax.experimental import pallas as pl
from jax.experimental.pallas import tpu as pltpu

# ----------------------- static config -----------------------
N_FREQS = 10
# reference: a, b = (1, N_freqs - 1); freq_bands = 2 ** linspace(a, b, N_freqs)
FREQS = [float(f) for f in (2.0 ** np.linspace(1.0, N_FREQS - 1, N_FREQS))]
POSENC_DIM = 3 + 2 * N_FREQS * 3          # 63
SINCOS_DIM = 3 * N_FREQS                  # 30 (per sin / per cos block)


# ----------------------- fused Pallas kernel -----------------------
def _proj_stats_kernel(x_ref, e2_ref, wx_ref, wsc_ref, bias_ref,     # inputs
                       out_ref, max_ref, std_ref,                    # outputs
                       max_sc, sum_sc, sumsq_sc, ref_sc,             # VMEM scratch
                       *, n_points, tile_n, needs_mask, inv_n, inv_nm1):
    """Per (batch b, point-tile n):
         x_ref   : (1, tile_n, Craw)   raw point features (coords | extra)
         e2_ref  : (Craw, 60)          freq-expansion matrix [sin-half | cos-half]
         wx_ref  : (Craw, dim)         raw-feature projection rows (posenc-v folded)
         wsc_ref : (60, dim)           [sin-rows ; cos-rows] projection weight
         bias_ref: (1, 1, dim)         per-batch bias (timestep emb folded in)
         out_ref : (1, tile_n, dim)    projected features (bf16 by default)
         max_ref/std_ref : (1, 1, dim) per-batch max / unbiased std (ddof=1), f32
    """
    n = pl.program_id(1)
    last = pl.num_programs(1) - 1

    xr = x_ref[0].astype(jnp.float32)                              # (tile_n, Craw)

    # ---- positional encoding: one tiny matmul builds freq*coord products for
    #      BOTH halves; cos is folded in via a +pi/2 phase -> ONE sin pass -----
    fv = jnp.dot(xr, e2_ref[...], preferred_element_type=jnp.float32)  # (tile_n, 60)
    col = jax.lax.broadcasted_iota(jnp.int32, (1, 2 * SINCOS_DIM), 1)
    phase = jnp.where(col >= SINCOS_DIM,
                      jnp.float32(math.pi / 2.0), jnp.float32(0.0))    # (1, 60)
    sc = jnp.sin(fv + phase)                                           # (tile_n, 60)

    # ---- input projection: two MXU matmuls (no lane-misaligned concat) -------
    acc = jnp.dot(xr, wx_ref[...], preferred_element_type=jnp.float32)
    acc = acc + jnp.dot(sc, wsc_ref[...], preferred_element_type=jnp.float32)
    acc = acc + bias_ref[0]                                            # (1, dim) bcast
    # Ragged tail rows of the last block are garbage-plus-bias; Pallas clips the
    # out-of-bounds part of the block on writeback, so this is safe.
    out_ref[0] = acc.astype(out_ref.dtype)

    # ---- streaming per-batch stats (max + shifted sum / sum-of-squares) ------
    @pl.when(n == 0)
    def _():
        max_sc[...] = jnp.full_like(max_sc, -jnp.inf)
        sum_sc[...] = jnp.zeros_like(sum_sc)
        sumsq_sc[...] = jnp.zeros_like(sumsq_sc)
        # per-feature shift (first point of the batch) for a numerically stable
        # one-pass unbiased variance: Var(X) == Var(X - ref)
        ref_sc[...] = acc[0:1, :]

    def _update(acc_for_max, diff):
        max_sc[...] = jnp.maximum(max_sc[...],
                                  jnp.max(acc_for_max, axis=0, keepdims=True))
        sum_sc[...] = sum_sc[...] + jnp.sum(diff, axis=0, keepdims=True)
        sumsq_sc[...] = sumsq_sc[...] + jnp.sum(diff * diff, axis=0, keepdims=True)

    if needs_mask:
        # Masking is only ever needed on the ragged LAST tile; all other tiles
        # take the unmasked (cheap) path.
        @pl.when(n != last)
        def _():
            _update(acc, acc - ref_sc[...])

        @pl.when(n == last)
        def _():
            row = jax.lax.broadcasted_iota(jnp.int32, (tile_n, 1), 0)
            valid = (n * tile_n + row) < n_points                   # (tile_n, 1)
            _update(jnp.where(valid, acc, -jnp.inf),
                    jnp.where(valid, acc - ref_sc[...], 0.0))
    else:
        _update(acc, acc - ref_sc[...])

    # ---- finalize at the last point-tile of this batch ------------------------
    @pl.when(n == last)
    def _():
        max_ref[0] = max_sc[...]
        s = sum_sc[...]
        # ddof=1; for N == 1 inv_nm1 is NaN on purpose (matches torch.std).
        var = (sumsq_sc[...] - s * s * inv_n) * inv_nm1
        std_ref[0] = jnp.sqrt(jnp.maximum(var, 0.0))


def fused_projection_stats(x_bnc, e2_freq, w_x, w_sc, bias_b1d, *,
                           dim, tile_n, out_dtype=jnp.bfloat16,
                           core_parallel_batch=False):
    """x_bnc:(B,N,Craw) -> (x:(B,N,dim)[out_dtype], x_max:(B,1,dim), x_std:(B,1,dim))."""
    B, N, Craw = x_bnc.shape
    if N <= tile_n:
        tile_n = N                           # one tile covers the batch (any N)
    else:
        tile_n = max(8, (tile_n // 8) * 8)   # sublane-aligned tiles
    num_tiles = pl.cdiv(N, tile_n)
    needs_mask = (N % tile_n) != 0
    # torch.std(dim=1) is unbiased (ddof=1); N==1 -> NaN, matching torch.
    inv_nm1 = 1.0 / (N - 1) if N > 1 else float("nan")

    kernel = functools.partial(
        _proj_stats_kernel, n_points=N, tile_n=tile_n,
        needs_mask=needs_mask, inv_n=1.0 / N, inv_nm1=inv_nm1)

    # CORE_PARALLEL gives real 2-TensorCore sharding over batch on v7x;
    # "parallel" is the portable default (single-TC v5e/v6e behave identically).
    batch_sem = pltpu.CORE_PARALLEL if core_parallel_batch else "parallel"

    return pl.pallas_call(
        kernel,
        out_shape=(jax.ShapeDtypeStruct((B, N, dim), out_dtype),
                   jax.ShapeDtypeStruct((B, 1, dim), jnp.float32),
                   jax.ShapeDtypeStruct((B, 1, dim), jnp.float32)),
        grid_spec=pltpu.PrefetchScalarGridSpec(
            num_scalar_prefetch=0,
            grid=(B, num_tiles),                       # reduction axis (N) last
            in_specs=[
                pl.BlockSpec((1, tile_n, Craw), lambda b, n: (b, n, 0)),
                pl.BlockSpec((Craw, 2 * SINCOS_DIM), lambda b, n: (0, 0)),
                pl.BlockSpec((Craw, dim), lambda b, n: (0, 0)),
                pl.BlockSpec((2 * SINCOS_DIM, dim), lambda b, n: (0, 0)),
                pl.BlockSpec((1, 1, dim), lambda b, n: (b, 0, 0)),
            ],
            out_specs=[
                pl.BlockSpec((1, tile_n, dim), lambda b, n: (b, n, 0)),
                pl.BlockSpec((1, 1, dim), lambda b, n: (b, 0, 0)),
                pl.BlockSpec((1, 1, dim), lambda b, n: (b, 0, 0)),
            ],
            scratch_shapes=[pltpu.VMEM((1, dim), jnp.float32),   # max
                            pltpu.VMEM((1, dim), jnp.float32),   # shifted sum
                            pltpu.VMEM((1, dim), jnp.float32),   # shifted sumsq
                            pltpu.VMEM((1, dim), jnp.float32)],  # shift reference
        ),
        compiler_params=pltpu.CompilerParams(
            dimension_semantics=(batch_sem, "arbitrary")),
    )(x_bnc, e2_freq, w_x, w_sc, bias_b1d)


# ----------------------- plain-JAX glue ops -----------------------
def get_timestep_embedding(embed_dim, t):
    # TODO(synk): get_timestep_embedding is not defined in the reference source;
    # using the standard DDPM sinusoidal timestep embedding.
    half = embed_dim // 2
    emb = math.log(10000.0) / (half - 1)
    emb = jnp.exp(jnp.arange(half, dtype=jnp.float32) * -emb)
    emb = t.astype(jnp.float32)[:, None] * emb[None, :]
    emb = jnp.concatenate([jnp.sin(emb), jnp.cos(emb)], axis=1)
    if embed_dim % 2 == 1:
        emb = jnp.pad(emb, ((0, 0), (0, 1)))
    return emb


def leaky_relu(x, slope=0.1):
    return jnp.where(x >= 0, x, slope * x)


class BasePointModelPallas:
    """Synthetic-weight port of BasePointModel.prepare_inputs + get_global_tensors.

    BasePointModel.forward / get_layers are abstract in the reference module,
    so this "__call__" runs prepare_inputs followed by get_global_tensors.
    # TODO(synk): subclass-specific `layers` / `output_projection` are abstract
    # in the reference, so they are not applied here.
    """

    def __init__(self, *, num_classes, embed_dim, extra_feature_channels,
                 dim=128, num_layers=6, key=None,
                 out_dtype=jnp.bfloat16, core_parallel_batch=False):
        self.extra_feature_channels = extra_feature_channels
        self.timestep_embed_dim = embed_dim
        self.output_dim = num_classes
        self.dim = dim
        self.num_layers = num_layers
        # bf16 projected-feature writeback halves the dominant HBM traffic on
        # every generation; stats stay f32.  Use jnp.float32 for exact output.
        self.out_dtype = out_dtype
        # Set True on v7x (2 TensorCores/chip) to split the batch axis across
        # cores; "parallel"/"arbitrary" alone does not shard.
        self.core_parallel_batch = core_parallel_batch

        key = jax.random.PRNGKey(0) if key is None else key
        ks = jax.random.split(key, 8)
        scale = 0.02
        e = embed_dim
        craw = 3 + extra_feature_channels
        in_feat = craw + POSENC_DIM + e

        # timestep_projection: Linear(e,e) -> LeakyReLU(0.1) -> Linear(e,e)
        self.tp_w1 = scale * jax.random.normal(ks[0], (e, e), jnp.float32)
        self.tp_b1 = scale * jax.random.normal(ks[1], (e,), jnp.float32)
        self.tp_w2 = scale * jax.random.normal(ks[2], (e, e), jnp.float32)
        self.tp_b2 = scale * jax.random.normal(ks[3], (e,), jnp.float32)

        # input_projection: Linear(in_feat, dim); stored (in, out).
        # concat order in prepare_inputs: (x_raw | posenc | t_emb)
        w_in = scale * jax.random.normal(ks[4], (in_feat, dim), jnp.float32)
        self.ip_b = scale * jax.random.normal(ks[5], (dim,), jnp.float32)
        self.w_in_full = w_in                      # kept for reference checking
        w_x = w_in[:craw]
        w_pe = w_in[craw:craw + POSENC_DIM]
        self.w_t = w_in[craw + POSENC_DIM:]

        # Offline weight surgery (zero runtime cost, exact same math):
        #  - posenc phi(v) starts with v == coords == x_raw[:, :3], so fold
        #    those 3 rows of w_pe into the coord rows of w_x.
        #  - reorder the interleaved [sin f0|cos f0|sin f1|...] rows into
        #    [all-sin ; all-cos] to match the kernel's single phase-shifted
        #    sin pass; keep the sin/cos weight as a SEPARATE matmul operand
        #    (no lane concat in the kernel).
        self.w_x_fused = w_x.at[:3].add(w_pe[:3])                    # (craw, dim)
        sin_rows = np.array([3 + 6 * i + k for i in range(N_FREQS) for k in range(3)])
        cos_rows = sin_rows + 3
        self.w_sc = jnp.concatenate([w_pe[sin_rows], w_pe[cos_rows]], axis=0)  # (60, dim)

        # frequency-expansion matrix, duplicated for the cos (phase-shifted) half:
        # fv[:, 3*i+k] = FREQS[i] * x_raw[:, k]  (k < 3), columns 30..59 repeat it.
        e_np = np.zeros((craw, SINCOS_DIM), np.float32)
        for i, f in enumerate(FREQS):
            for k in range(3):
                e_np[k, 3 * i + k] = f
        self.e2_freq = jnp.asarray(np.concatenate([e_np, e_np], axis=1))  # (craw, 60)

    def prepare_inputs_and_stats(self, inputs, t, *, tile_n):
        # inputs: (B, 3+S, N) channel-major, t: (B,)
        t_emb = get_timestep_embedding(self.timestep_embed_dim, t)
        h = leaky_relu(t_emb @ self.tp_w1 + self.tp_b1, 0.1)
        t_proj = h @ self.tp_w2 + self.tp_b2                        # (B, e)

        x_bnc = jnp.transpose(inputs, (0, 2, 1)).astype(jnp.float32)  # (B, N, 3+S)
        coords = x_bnc[:, :, :3]

        # fold t_proj @ W_t + bias into a per-batch bias (constant over N)
        bias = (t_proj @ self.w_t + self.ip_b)[:, None, :]          # (B, 1, dim)

        x, x_max, x_std = fused_projection_stats(
            x_bnc, self.e2_freq, self.w_x_fused, self.w_sc, bias,
            dim=self.dim, tile_n=tile_n, out_dtype=self.out_dtype,
            core_parallel_batch=self.core_parallel_batch)
        return x, coords, x_max, x_std

    def __call__(self, inputs, t, *, tile_n=1024, repeat_pools=True):
        x, coords, x_max, x_std = self.prepare_inputs_and_stats(
            inputs, t, tile_n=tile_n)
        if repeat_pools:
            # torch does .repeat(1, N, 1); broadcast_to is free when fused into
            # a downstream in-jit consumer (no redundant HBM tile).
            B, N, D = x.shape
            x_pool_max = jnp.broadcast_to(x_max, (B, N, D))
            x_pool_std = jnp.broadcast_to(x_std, (B, N, D))
        else:
            x_pool_max, x_pool_std = x_max, x_std
        return x, coords, x_pool_max, x_pool_std


# ----------------------- pure-JAX reference (for checking) -----------------------
def reference_forward(model, inputs, t):
    B, _, N = inputs.shape
    t_emb = get_timestep_embedding(model.timestep_embed_dim, t)
    h = leaky_relu(t_emb @ model.tp_w1 + model.tp_b1, 0.1)
    t_proj = h @ model.tp_w2 + model.tp_b2
    x_bnc = jnp.transpose(inputs, (0, 2, 1)).astype(jnp.float32)
    coords = x_bnc[:, :, :3]
    pe = [coords]
    for f in FREQS:
        fv = f * coords
        pe += [jnp.sin(fv), jnp.cos(fv)]
    pe = jnp.concatenate(pe, axis=-1)
    t_rep = jnp.broadcast_to(t_proj[:, None, :], (B, N, t_proj.shape[-1]))
    feats = jnp.concatenate([x_bnc, pe, t_rep], axis=-1)
    x = jnp.einsum("bnf,fd->bnd", feats, model.w_in_full,
                   precision=jax.lax.Precision.HIGHEST) + model.ip_b
    x_max = jnp.max(x, axis=1, keepdims=True)
    x_std = jnp.std(x, axis=1, keepdims=True, ddof=1)
    return x, coords, x_max, x_std


def _check(model, inputs, t, tile_n, tag):
    fwd = jax.jit(lambda a, b: model(a, b, tile_n=tile_n))
    x, coords, x_pool_max, x_pool_std = fwd(inputs, t)
    jax.block_until_ready((x, coords, x_pool_max, x_pool_std))

    B, _, N = inputs.shape
    D = model.dim
    assert x.shape == (B, N, D)
    assert coords.shape == (B, N, 3)
    assert x_pool_max.shape == (B, N, D)
    assert x_pool_std.shape == (B, N, D)

    x_r, coords_r, max_r, std_r = reference_forward(model, inputs, t)
    assert bool(jnp.allclose(coords, coords_r)), f"{tag}: coords mismatch"
    assert bool(jnp.allclose(x.astype(jnp.float32), x_r, atol=1e-2, rtol=1e-2)), \
        f"{tag}: projection mismatch"
    assert bool(jnp.allclose(x_pool_max, jnp.broadcast_to(max_r, (B, N, D)),
                             atol=1e-2, rtol=1e-2)), f"{tag}: max mismatch"
    assert bool(jnp.allclose(x_pool_std, jnp.broadcast_to(std_r, (B, N, D)),
                             atol=1e-2, rtol=1e-2)), f"{tag}: std mismatch"


# ----------------------- demo -----------------------
if __name__ == "__main__":
    B = 2
    S = 4          # extra_feature_channels
    EMBED = 32
    DIM = 128

    key = jax.random.PRNGKey(0)
    k_in, k_in2, k_model = jax.random.split(key, 3)

    t = jnp.array([3.0, 17.0], dtype=jnp.float32)                  # (B,)
    model = BasePointModelPallas(num_classes=6, embed_dim=EMBED,
                                 extra_feature_channels=S, dim=DIM,
                                 key=k_model)

    # 1) small single-tile case (N fits one block)
    inputs = jax.random.normal(k_in, (B, 3 + S, 16), jnp.float32)   # (B, 3+S, N)
    _check(model, inputs, t, tile_n=1024, tag="single-tile")

    # 2) multi-tile + ragged-tail case (exercises streaming stats + last-tile mask)
    inputs2 = jax.random.normal(k_in2, (B, 3 + S, 20), jnp.float32)
    _check(model, inputs2, t, tile_n=8, tag="ragged")

    print("KERNEL_OK")
</pallas_src>

<mosaic_0001>
module attributes {stable_mosaic.version = 11 : i64} {
  func.func @_proj_stats_kernel(%arg0: i32, %arg1: i32, %arg2: memref<1x16x7xf32, #tpu.memory_space<vmem>>, %arg3: memref<7x60xf32, #tpu.memory_space<vmem>>, %arg4: memref<7x128xf32, #tpu.memory_space<vmem>>, %arg5: memref<60x128xf32, #tpu.memory_space<vmem>>, %arg6: memref<1x1x128xf32, #tpu.memory_space<vmem>>, %arg7: memref<1x16x128xbf16, #tpu.memory_space<vmem>>, %arg8: memref<1x1x128xf32, #tpu.memory_space<vmem>>, %arg9: memref<1x1x128xf32, #tpu.memory_space<vmem>>, %arg10: memref<1x128xf32, #tpu.memory_space<vmem>>, %arg11: memref<1x128xf32, #tpu.memory_space<vmem>>, %arg12: memref<1x128xf32, #tpu.memory_space<vmem>>, %arg13: memref<1x128xf32, #tpu.memory_space<vmem>>) attributes {dimension_semantics = [#tpu.dimension_semantics<parallel>, #tpu.dimension_semantics<arbitrary>], iteration_bounds = array<i64: 2, 1>, scalar_prefetch = 0 : i64, scratch_operands = 4 : i64, tpu.core_type = #tpu.core_type<tc>, window_params = [{transform_indices = @transform_0, window_bounds = array<i64: 1, 16, 7>}, {pipeline_mode = #tpu.pipeline_mode<synchronous>, transform_indices = @transform_1, window_bounds = array<i64: 7, 60>}, {pipeline_mode = #tpu.pipeline_mode<synchronous>, transform_indices = @transform_2, window_bounds = array<i64: 7, 128>}, {pipeline_mode = #tpu.pipeline_mode<synchronous>, transform_indices = @transform_3, window_bounds = array<i64: 60, 128>}, {transform_indices = @transform_4, window_bounds = array<i64: 1, 1, 128>}, {transform_indices = @transform_5, window_bounds = array<i64: 1, 16, 128>}, {transform_indices = @transform_6, window_bounds = array<i64: 1, 1, 128>}, {transform_indices = @transform_7, window_bounds = array<i64: 1, 1, 128>}]} {
    %c0 = arith.constant 0 : index
    %c0_0 = arith.constant 0 : index
    %c0_1 = arith.constant 0 : index
    %0 = vector.load %arg2[%c0, %c0_0, %c0_1] : memref<1x16x7xf32, #tpu.memory_space<vmem>>, vector<1x16x7xf32>
    %1 = vector.shape_cast %0 : vector<1x16x7xf32> to vector<16x7xf32>
    %c0_2 = arith.constant 0 : index
    %c0_3 = arith.constant 0 : index
    %2 = vector.load %arg3[%c0_2, %c0_3] : memref<7x60xf32, #tpu.memory_space<vmem>>, vector<7x60xf32>
    %cst = arith.constant dense<0.000000e+00> : vector<16x60xf32>
    %3 = tpu.matmul %1, %2, %cst {dimension_numbers = #tpu.dot_dimension_numbers<[1], [0], [0], [1], [0, 0, 1, 1], [], []>} : vector<16x7xf32>, vector<7x60xf32>, vector<16x60xf32> -> vector<16x60xf32>
    %4 = tpu.iota {dimensions = array<i32: 1>} : vector<1x60xi32>
    %c30_i32 = arith.constant 30 : i32
    %5 = vector.broadcast %c30_i32 : i32 to vector<1x60xi32>
    %6 = arith.cmpi sge, %4, %5 : vector<1x60xi32>
    %cst_4 = arith.constant 1.57079637 : f32
    %cst_5 = arith.constant 0.000000e+00 : f32
    %7 = vector.broadcast %cst_4 : f32 to vector<1x60xf32>
    %8 = vector.broadcast %cst_5 : f32 to vector<1x60xf32>
    %9 = arith.select %6, %7, %8 : vector<1x60xi1>, vector<1x60xf32>
    %10 = vector.broadcast %9 : vector<1x60xf32> to vector<16x60xf32>
    %11 = arith.addf %3, %10 : vector<16x60xf32>
    %12 = math.sin %11 : vector<16x60xf32>
    %c0_6 = arith.constant 0 : index
    %c0_7 = arith.constant 0 : index
    %13 = vector.load %arg4[%c0_6, %c0_7] : memref<7x128xf32, #tpu.memory_space<vmem>>, vector<7x128xf32>
    %cst_8 = arith.constant dense<0.000000e+00> : vector<16x128xf32>
    %14 = tpu.matmul %1, %13, %cst_8 {dimension_numbers = #tpu.dot_dimension_numbers<[1], [0], [0], [1], [0, 0, 1, 1], [], []>} : vector<16x7xf32>, vector<7x128xf32>, vector<16x128xf32> -> vector<16x128xf32>
    %c0_9 = arith.constant 0 : index
    %c0_10 = arith.constant 0 : index
    %15 = vector.load %arg5[%c0_9, %c0_10] : memref<60x128xf32, #tpu.memory_space<vmem>>, vector<60x128xf32>
    %cst_11 = arith.constant dense<0.000000e+00> : vector<16x128xf32>
    %16 = tpu.matmul %12, %15, %cst_11 {dimension_numbers = #tpu.dot_dimension_numbers<[1], [0], [0], [1], [0, 0, 1, 1], [], []>} : vector<16x60xf32>, vector<60x128xf32>, vector<16x128xf32> -> vector<16x128xf32>
    %17 = arith.addf %14, %16 : vector<16x128xf32>
    %c0_12 = arith.constant 0 : index
    %c0_13 = arith.constant 0 : index
    %c0_14 = arith.constant 0 : index
    %18 = vector.load %arg6[%c0_12, %c0_13, %c0_14] : memref<1x1x128xf32, #tpu.memory_space<vmem>>, vector<1x1x128xf32>
    %19 = vector.shape_cast %18 : vector<1x1x128xf32> to vector<1x128xf32>
    %20 = vector.broadcast %19 : vector<1x128xf32> to vector<16x128xf32>
    %21 = arith.addf %17, %20 : vector<16x128xf32>
    %22 = arith.truncf %21 : vector<16x128xf32> to vector<16x128xbf16>
    %c0_15 = arith.constant 0 : index
    %c0_16 = arith.constant 0 : index
    %c0_17 = arith.constant 0 : index
    %23 = vector.load %arg7[%c0_15, %c0_16, %c0_17] : memref<1x16x128xbf16, #tpu.memory_space<vmem>>, vector<1x16x128xbf16>
    %24 = vector.shape_cast %23 : vector<1x16x128xbf16> to vector<16x128xbf16>
    %25 = vector.shape_cast %22 : vector<16x128xbf16> to vector<1x16x128xbf16>
    tpu.vector_store %arg7[%c0_15, %c0_16, %c0_17], %25 {strides = array<i32>} : memref<1x16x128xbf16, #tpu.memory_space<vmem>>, vector<1x16x128xbf16>,
    %c0_i32 = arith.constant 0 : i32
    %26 = arith.cmpi eq, %arg1, %c0_i32 : i32
    %27 = arith.extui %26 : i1 to i32
    %c0_i32_18 = arith.constant 0 : i32
    %28 = arith.cmpi ne, %27, %c0_i32_18 : i32
    scf.if %28 {
      %cst_38 = arith.constant 0xFF800000 : f32
      %51 = vector.broadcast %cst_38 : f32 to vector<1x128xf32>
      %c0_39 = arith.constant 0 : index
      %c0_40 = arith.constant 0 : index
      %52 = vector.load %arg10[%c0_39, %c0_40] : memref<1x128xf32, #tpu.memory_space<vmem>>, vector<1x128xf32>
      tpu.vector_store %arg10[%c0_39, %c0_40], %51 {strides = array<i32>} : memref<1x128xf32, #tpu.memory_space<vmem>>, vector<1x128xf32>,
      %cst_41 = arith.constant 0.000000e+00 : f32
      %53 = vector.broadcast %cst_41 : f32 to vector<1x128xf32>
      %c0_42 = arith.constant 0 : index
      %c0_43 = arith.constant 0 : index
      %54 = vector.load %arg11[%c0_42, %c0_43] : memref<1x128xf32, #tpu.memory_space<vmem>>, vector<1x128xf32>
      tpu.vector_store %arg11[%c0_42, %c0_43], %53 {strides = array<i32>} : memref<1x128xf32, #tpu.memory_space<vmem>>, vector<1x128xf32>,
      %cst_44 = arith.constant 0.000000e+00 : f32
      %55 = vector.broadcast %cst_44 : f32 to vector<1x128xf32>
      %c0_45 = arith.constant 0 : index
      %c0_46 = arith.constant 0 : index
      %56 = vector.load %arg12[%c0_45, %c0_46] : memref<1x128xf32, #tpu.memory_space<vmem>>, vector<1x128xf32>
      tpu.vector_store %arg12[%c0_45, %c0_46], %55 {strides = array<i32>} : memref<1x128xf32, #tpu.memory_space<vmem>>, vector<1x128xf32>,
      %57 = vector.extract_strided_slice %21 {offsets = [0, 0], sizes = [1, 128], strides = [1, 1]} : vector<16x128xf32> to vector<1x128xf32>
      %c0_47 = arith.constant 0 : index
      %c0_48 = arith.constant 0 : index
      %58 = vector.load %arg13[%c0_47, %c0_48] : memref<1x128xf32, #tpu.memory_space<vmem>>, vector<1x128xf32>
      tpu.vector_store %arg13[%c0_47, %c0_48], %57 {strides = array<i32>} : memref<1x128xf32, #tpu.memory_space<vmem>>, vector<1x128xf32>,
    } else {
    }
    %c0_19 = arith.constant 0 : index
    %c0_20 = arith.constant 0 : index
    %29 = vector.load %arg13[%c0_19, %c0_20] : memref<1x128xf32, #tpu.memory_space<vmem>>, vector<1x128xf32>
    %30 = vector.broadcast %29 : vector<1x128xf32> to vector<16x128xf32>
    %31 = arith.subf %21, %30 : vector<16x128xf32>
    %c0_21 = arith.constant 0 : index
    %c0_22 = arith.constant 0 : index
    %32 = vector.load %arg10[%c0_21, %c0_22] : memref<1x128xf32, #tpu.memory_space<vmem>>, vector<1x128xf32>
    %cst_23 = arith.constant dense<0xFF800000> : vector<128xf32>
    %33 = vector.multi_reduction <maximumf>, %21, %cst_23 [0] : vector<16x128xf32> to vector<128xf32>
    %34 = vector.shape_cast %33 : vector<128xf32> to vector<1x128xf32>
    %35 = arith.maximumf %32, %34 : vector<1x128xf32>
    %c0_24 = arith.constant 0 : index
    %c0_25 = arith.constant 0 : index
    %36 = vector.load %arg10[%c0_24, %c0_25] : memref<1x128xf32, #tpu.memory_space<vmem>>, vector<1x128xf32>
    tpu.vector_store %arg10[%c0_24, %c0_25], %35 {strides = array<i32>} : memref<1x128xf32, #tpu.memory_space<vmem>>, vector<1x128xf32>,
    %c0_26 = arith.constant 0 : index
    %c0_27 = arith.constant 0 : index
    %37 = vector.load %arg11[%c0_26, %c0_27] : memref<1x128xf32, #tpu.memory_space<vmem>>, vector<1x128xf32>
    %cst_28 = arith.constant dense<0.000000e+00> : vector<128xf32>
    %38 = vector.multi_reduction <add>, %31, %cst_28 [0] : vector<16x128xf32> to vector<128xf32>
    %39 = vector.shape_cast %38 : vector<128xf32> to vector<1x128xf32>
    %40 = arith.addf %37, %39 : vector<1x128xf32>
    %c0_29 = arith.constant 0 : index
    %c0_30 = arith.constant 0 : index
    %41 = vector.load %arg11[%c0_29, %c0_30] : memref<1x128xf32, #tpu.memory_space<vmem>>, vector<1x128xf32>
    tpu.vector_store %arg11[%c0_29, %c0_30], %40 {strides = array<i32>} : memref<1x128xf32, #tpu.memory_space<vmem>>, vector<1x128xf32>,
    %c0_31 = arith.constant 0 : index
    %c0_32 = arith.constant 0 : index
    %42 = vector.load %arg12[%c0_31, %c0_32] : memref<1x128xf32, #tpu.memory_space<vmem>>, vector<1x128xf32>
    %43 = arith.mulf %31, %31 : vector<16x128xf32>
    %cst_33 = arith.constant dense<0.000000e+00> : vector<128xf32>
    %44 = vector.multi_reduction <add>, %43, %cst_33 [0] : vector<16x128xf32> to vector<128xf32>
    %45 = vector.shape_cast %44 : vector<128xf32> to vector<1x128xf32>
    %46 = arith.addf %42, %45 : vector<1x128xf32>
    %c0_34 = arith.constant 0 : index
    %c0_35 = arith.constant 0 : index
    %47 = vector.load %arg12[%c0_34, %c0_35] : memref<1x128xf32, #tpu.memory_space<vmem>>, vector<1x128xf32>
    tpu.vector_store %arg12[%c0_34, %c0_35], %46 {strides = array<i32>} : memref<1x128xf32, #tpu.memory_space<vmem>>, vector<1x128xf32>,
    %c0_i32_36 = arith.constant 0 : i32
    %48 = arith.cmpi eq, %arg1, %c0_i32_36 : i32
    %49 = arith.extui %48 : i1 to i32
    %c0_i32_37 = arith.constant 0 : i32
    %50 = arith.cmpi ne, %49, %c0_i32_37 : i32
    scf.if %50 {
      %c0_38 = arith.constant 0 : index
      %c0_39 = arith.constant 0 : index
      %51 = vector.load %arg10[%c0_38, %c0_39] : memref<1x128xf32, #tpu.memory_space<vmem>>, vector<1x128xf32>
      %c0_40 = arith.constant 0 : index
      %c0_41 = arith.constant 0 : index
      %c0_42 = arith.constant 0 : index
      %52 = vector.load %arg8[%c0_40, %c0_41, %c0_42] : memref<1x1x128xf32, #tpu.memory_space<vmem>>, vector<1x1x128xf32>
      %53 = vector.shape_cast %52 : vector<1x1x128xf32> to vector<1x128xf32>
      %54 = vector.shape_cast %51 : vector<1x128xf32> to vector<1x1x128xf32>
      tpu.vector_store %arg8[%c0_40, %c0_41, %c0_42], %54 {strides = array<i32>} : memref<1x1x128xf32, #tpu.memory_space<vmem>>, vector<1x1x128xf32>,
      %c0_43 = arith.constant 0 : index
      %c0_44 = arith.constant 0 : index
      %55 = vector.load %arg11[%c0_43, %c0_44] : memref<1x128xf32, #tpu.memory_space<vmem>>, vector<1x128xf32>
      %c0_45 = arith.constant 0 : index
      %c0_46 = arith.constant 0 : index
      %56 = vector.load %arg12[%c0_45, %c0_46] : memref<1x128xf32, #tpu.memory_space<vmem>>, vector<1x128xf32>
      %57 = arith.mulf %55, %55 : vector<1x128xf32>
      %cst_47 = arith.constant 6.250000e-02 : f32
      %58 = vector.broadcast %cst_47 : f32 to vector<1x128xf32>
      %59 = arith.mulf %57, %58 : vector<1x128xf32>
      %60 = arith.subf %56, %59 : vector<1x128xf32>
      %cst_48 = arith.constant 0.0666666701 : f32
      %61 = vector.broadcast %cst_48 : f32 to vector<1x128xf32>
      %62 = arith.mulf %60, %61 : vector<1x128xf32>
      %cst_49 = arith.constant 0.000000e+00 : f32
      %63 = vector.broadcast %cst_49 : f32 to vector<1x128xf32>
      %64 = arith.maximumf %62, %63 : vector<1x128xf32>
      %65 = math.sqrt %64 : vector<1x128xf32>
      %c0_50 = arith.constant 0 : index
      %c0_51 = arith.constant 0 : index
      %c0_52 = arith.constant 0 : index
      %66 = vector.load %arg9[%c0_50, %c0_51, %c0_52] : memref<1x1x128xf32, #tpu.memory_space<vmem>>, vector<1x1x128xf32>
      %67 = vector.shape_cast %66 : vector<1x1x128xf32> to vector<1x128xf32>
      %68 = vector.shape_cast %65 : vector<1x128xf32> to vector<1x1x128xf32>
      tpu.vector_store %arg9[%c0_50, %c0_51, %c0_52], %68 {strides = array<i32>} : memref<1x1x128xf32, #tpu.memory_space<vmem>>, vector<1x1x128xf32>,
    } else {
    }
    return
  }
  func.func @transform_0(%arg0: i32, %arg1: i32) -> (i32, i32, i32) {
    %c0_i32 = arith.constant 0 : i32
    %c0_i32_0 = arith.constant 0 : i32
    return %arg0, %arg1, %c0_i32 : i32, i32, i32
  }
  func.func @transform_1(%arg0: i32, %arg1: i32) -> (i32, i32) {
    %c0_i32 = arith.constant 0 : i32
    %c0_i32_0 = arith.constant 0 : i32
    %c0_i32_1 = arith.constant 0 : i32
    return %c0_i32, %c0_i32_0 : i32, i32
  }
  func.func @transform_2(%arg0: i32, %arg1: i32) -> (i32, i32) {
    %c0_i32 = arith.constant 0 : i32
    %c0_i32_0 = arith.constant 0 : i32
    %c0_i32_1 = arith.constant 0 : i32
    return %c0_i32, %c0_i32_0 : i32, i32
  }
  func.func @transform_3(%arg0: i32, %arg1: i32) -> (i32, i32) {
    %c0_i32 = arith.constant 0 : i32
    %c0_i32_0 = arith.constant 0 : i32
    %c0_i32_1 = arith.constant 0 : i32
    return %c0_i32, %c0_i32_0 : i32, i32
  }
  func.func @transform_4(%arg0: i32, %arg1: i32) -> (i32, i32, i32) {
    %c0_i32 = arith.constant 0 : i32
    %c0_i32_0 = arith.constant 0 : i32
    %c0_i32_1 = arith.constant 0 : i32
    return %arg0, %c0_i32, %c0_i32_0 : i32, i32, i32
  }
  func.func @transform_5(%arg0: i32, %arg1: i32) -> (i32, i32, i32) {
    %c0_i32 = arith.constant 0 : i32
    %c0_i32_0 = arith.constant 0 : i32
    return %arg0, %arg1, %c0_i32 : i32, i32, i32
  }
  func.func @transform_6(%arg0: i32, %arg1: i32) -> (i32, i32, i32) {
    %c0_i32 = arith.constant 0 : i32
    %c0_i32_0 = arith.constant 0 : i32
    %c0_i32_1 = arith.constant 0 : i32
    return %arg0, %c0_i32, %c0_i32_0 : i32, i32, i32
  }
  func.func @transform_7(%arg0: i32, %arg1: i32) -> (i32, i32, i32) {
    %c0_i32 = arith.constant 0 : i32
    %c0_i32_0 = arith.constant 0 : i32
    %c0_i32_1 = arith.constant 0 : i32
    return %arg0, %c0_i32, %c0_i32_0 : i32, i32, i32
  }
}

</mosaic_0001>

<llo_original>
// kernel: _lambda_.1
$region0: #{_lambda_.1}
  #allocation0 [shape = 'u32[]', space=smem, size = 0x4, offset = 0x4, fixed_abs, tag = 'smem constant byte address 0x4 - core index']
  #allocation1 [shape = 'u32[144,128]{1,0:T(1,128)}', space=vmem, size = 0x12000, scoped, tag = 'internal scratch']
  #allocation2 [shape = 'f32[1,128]{1,0:T(1,128)}', space=vmem, size = 0x200, scoped, tag = 'scratch operand']
  #allocation3 [shape = 'f32[1,128]{1,0:T(1,128)}', space=vmem, size = 0x200, scoped, tag = 'scratch operand']
  #allocation4 [shape = 'f32[1,128]{1,0:T(1,128)}', space=vmem, size = 0x200, scoped, tag = 'scratch operand']
  #allocation5 [shape = 'f32[1,128]{1,0:T(1,128)}', space=vmem, size = 0x200, scoped, tag = 'scratch operand']
  %s0 = inlined_call_operand.vmem [shape: f32[2,16,7], index: 0, kind: input, shape index: {}]
  %s1 = inlined_call_operand.vmem [shape: f32[7,60], index: 1, kind: input, shape index: {}]
  %s2 = inlined_call_operand.vmem [shape: f32[7,128], index: 2, kind: input, shape index: {}]
  %s3 = inlined_call_operand.vmem [shape: f32[60,128], index: 3, kind: input, shape index: {}]
  %s4 = inlined_call_operand.vmem [shape: f32[2,1,128], index: 4, kind: input, shape index: {}]
  %s5 = inlined_call_operand.hbm [shape: bf16[2,16,128], index: 5, kind: output, shape index: {0}]
  %s6 = inlined_call_operand.vmem [shape: f32[2,1,128], index: 6, kind: output, shape index: {1}]
  %s7 = inlined_call_operand.vmem [shape: f32[2,1,128], index: 7, kind: output, shape index: {2}]
  %8 = xla_tuple %s5, %s6, %s7
  %s9 = sld [smem:[#allocation0]]
  $region77: #{_lambda_.1} parent=0
    _
  %s11 = ssub.s32 1, %s9
  %s12 = scalar_select 0, %s11, %s9
  $region1: #{_lambda_.1} parent=0
    #allocation6 [shape = 'u8[8192]{0}', space=vmem, size = 0x2000, scoped, tag = 'output window, operand 0']
    #allocation7 [shape = 's32[2]{0}', space=sflag, size = 0x8, scoped, tag = 'scoped memory for _lambda_.1']
    %13 = vsyncpa [#allocation7], 0
    %s14 = scalar_lea.sflag [#allocation7], 1
    %15 = vsyncpa %s14, 0
    loop: start=0, step=1, limit=4
    $region2: #{_lambda_.1} parent=1 // loop_pre_header
      _
    $region3: #{_lambda_.1} parent=1 // loop_header
      %s17 = sphi 0, %s21
      %p18 = scmp.ge.s32.totalorder %s17, 4
      %s24 = sphi 0, %s36
      %s25 = sphi 0, %s32
      %s26 = sphi 0, %s24
      %s27 = sphi 0, %s25
      %s28 = sphi 0, %s26
      %s29 = sphi 0, %s27
      %s41 = sphi 0, %s43
      %s44 = sphi 0, %s41
      %s45 = sphi 0, %s44
      %s61 = sphi 0, %s45
      %s65 = sphi 0, %s65
      %s67 = sphi 0, %s65
      %s68 = sphi 0, %s67
      %s82 = sphi 0, %s68
      %s86 = sphi 0, %s86
      %s88 = sphi 0, %s86
      %s89 = sphi 0, %s88
      %s103 = sphi 0, %s89
      %s107 = sphi 0, %s107
      %s109 = sphi 0, %s107
      %s110 = sphi 0, %s109
      %s124 = sphi 0, %s110
      %s130 = sphi 0, %s132
      %s133 = sphi 0, %s130
      %s134 = sphi 0, %s133
      %s150 = sphi 0, %s134
      %s158 = sphi 0, %s160
      %s161 = sphi 0, %s158
      %s162 = sphi 0, %s161
      %s178 = sphi 0, %s162
      %s184 = sphi 0, %s186
      %s187 = sphi 0, %s184
      %s188 = sphi 0, %s187
      %s204 = sphi 0, %s188
      %s210 = sphi 0, %s212
      %s213 = sphi 0, %s210
      %s214 = sphi 0, %s213
      %s230 = sphi 0, %s214
    $region4: #{_lambda_.1} parent=1 // loop_header_branch
      %20 = sbr.rel (%p18) target = $region8
    $region5: #{_lambda_.1} parent=1 // loop_body
      %s22 = ssub.s32 %s17, 1
      %s23 = ssub.s32 %s17, 2
      %s30 = sadd.s32 1, %s25
      %p31 = scmp.ge.s32.totalorder %s30, 1
      %s32 = scalar_select %p31, 0, %s30
      %s33 = sadd.s32 1, %s24
      %s34 = scalar_select %p31, %s33, %s24
      %p35 = scmp.ge.s32.totalorder %s34, 2
      %s36 = scalar_select %p35, 0, %s34
      %s37 = ssub.s32 %s24, %s36
      %s38 = ssub.s32 %s25, %s32
      %s39 = sor.u32 %s37, %s38
      %p40 = scmp.eq.s32.totalorder %s39, 0
      %s42 = sadd.s32 %s41, 1
      %s43 = scalar_select %p40, %s41, %s42
      %p46 = pneg %p40
      %p47 = scmp.eq.s32.totalorder %s17, 1
      %p48 = por %p46, %p47
      %p49 = scmp.ne.s32.totalorder %s41, %s44
      %p50 = scmp.eq.s32.totalorder %s17, 0
      %p51 = por %p49, %p50
      %p52 = scmp.ne.s32.totalorder %s41, %s44
      %p53 = scmp.eq.s32.totalorder %s22, 1
      %p54 = por %p52, %p53
      %p55 = scmp.ne.s32.totalorder %s44, %s45
      %p56 = scmp.eq.s32.totalorder %s22, 0
      %p57 = por %p55, %p56
      %p58 = scmp.ne.s32.totalorder %s44, %s45
      %p59 = scmp.eq.s32.totalorder %s23, 1
      %p60 = por %p58, %p59
      %p62 = scmp.ne.s32.totalorder %s45, %s61
      %p63 = scmp.eq.s32.totalorder %s23, 0
      %p64 = por %p62, %p63
      %s66 = sadd.s32 %s65, 1
      %p69 = scmp.eq.s32.totalorder %s17, 1
      %p70 = scmp.ne.s32.totalorder %s65, %s67
      %p71 = scmp.eq.s32.totalorder %s17, 0
      %p72 = por %p70, %p71
      %p73 = scmp.ne.s32.totalorder %s65, %s67
      %p74 = scmp.eq.s32.totalorder %s22, 1
      %p75 = por %p73, %p74
      %p76 = scmp.ne.s32.totalorder %s67, %s68
      %p77 = scmp.eq.s32.totalorder %s22, 0
      %p78 = por %p76, %p77
      %p79 = scmp.ne.s32.totalorder %s67, %s68
      %p80 = scmp.eq.s32.totalorder %s23, 1
      %p81 = por %p79, %p80
      %p83 = scmp.ne.s32.totalorder %s68, %s82
      %p84 = scmp.eq.s32.totalorder %s23, 0
      %p85 = por %p83, %p84
      %s87 = sadd.s32 %s86, 1
      %p90 = scmp.eq.s32.totalorder %s17, 1
      %p91 = scmp.ne.s32.totalorder %s86, %s88
      %p92 = scmp.eq.s32.totalorder %s17, 0
      %p93 = por %p91, %p92
      %p94 = scmp.ne.s32.totalorder %s86, %s88
      %p95 = scmp.eq.s32.totalorder %s22, 1
      %p96 = por %p94, %p95
      %p97 = scmp.ne.s32.totalorder %s88, %s89
      %p98 = scmp.eq.s32.totalorder %s22, 0
      %p99 = por %p97, %p98
      %p100 = scmp.ne.s32.totalorder %s88, %s89
      %p101 = scmp.eq.s32.totalorder %s23, 1
      %p102 = por %p100, %p101
      %p104 = scmp.ne.s32.totalorder %s89, %s103
      %p105 = scmp.eq.s32.totalorder %s23, 0
      %p106 = por %p104, %p105
      %s108 = sadd.s32 %s107, 1
      %p111 = scmp.eq.s32.totalorder %s17, 1
      %p112 = scmp.ne.s32.totalorder %s107, %s109
      %p113 = scmp.eq.s32.totalorder %s17, 0
      %p114 = por %p112, %p113
      %p115 = scmp.ne.s32.totalorder %s107, %s109
      %p116 = scmp.eq.s32.totalorder %s22, 1
      %p117 = por %p115, %p116
      %p118 = scmp.ne.s32.totalorder %s109, %s110
      %p119 = scmp.eq.s32.totalorder %s22, 0
      %p120 = por %p118, %p119
      %p121 = scmp.ne.s32.totalorder %s109, %s110
      %p122 = scmp.eq.s32.totalorder %s23, 1
      %p123 = por %p121, %p122
      %p125 = scmp.ne.s32.totalorder %s110, %s124
      %p126 = scmp.eq.s32.totalorder %s23, 0
      %p127 = por %p125, %p126
      %s128 = ssub.s32 %s24, %s36
      %p129 = scmp.eq.s32.totalorder %s128, 0
      %s131 = sadd.s32 %s130, 1
      %s132 = scalar_select %p129, %s130, %s131
      %p135 = pneg %p129
      %p136 = scmp.eq.s32.totalorder %s17, 1
      %p137 = por %p135, %p136
      %p138 = scmp.ne.s32.totalorder %s130, %s133
      %p139 = scmp.eq.s32.totalorder %s17, 0
      %p140 = por %p138, %p139
      %p141 = scmp.ne.s32.totalorder %s130, %s133
      %p142 = scmp.eq.s32.totalorder %s22, 1
      %p143 = por %p141, %p142
      %p144 = scmp.ne.s32.totalorder %s133, %s134
      %p145 = scmp.eq.s32.totalorder %s22, 0
      %p146 = por %p144, %p145
      %p147 = scmp.ne.s32.totalorder %s133, %s134
      %p148 = scmp.eq.s32.totalorder %s23, 1
      %p149 = por %p147, %p148
      %p151 = scmp.ne.s32.totalorder %s134, %s150
      %p152 = scmp.eq.s32.totalorder %s23, 0
      %p153 = por %p151, %p152
      %s154 = ssub.s32 %s24, %s36
      %s155 = ssub.s32 %s25, %s32
      %s156 = sor.u32 %s154, %s155
      %p157 = scmp.eq.s32.totalorder %s156, 0
      %s159 = sadd.s32 %s158, 1
      %s160 = scalar_select %p157, %s158, %s159
      %p163 = pneg %p157
      %p164 = scmp.eq.s32.totalorder %s17, 1
      %p165 = por %p163, %p164
      %p166 = scmp.ne.s32.totalorder %s158, %s161
      %p167 = scmp.eq.s32.totalorder %s17, 0
      %p168 = por %p166, %p167
      %p169 = scmp.ne.s32.totalorder %s158, %s161
      %p170 = scmp.eq.s32.totalorder %s22, 1
      %p171 = por %p169, %p170
      %p172 = scmp.ne.s32.totalorder %s161, %s162
      %p173 = scmp.eq.s32.totalorder %s22, 0
      %p174 = por %p172, %p173
      %p175 = scmp.ne.s32.totalorder %s161, %s162
      %p176 = scmp.eq.s32.totalorder %s23, 1
      %p177 = por %p175, %p176
      %p179 = scmp.ne.s32.totalorder %s162, %s178
      %p180 = scmp.eq.s32.totalorder %s23, 0
      %p181 = por %p179, %p180
      %s182 = ssub.s32 %s24, %s36
      %p183 = scmp.eq.s32.totalorder %s182, 0
      %s185 = sadd.s32 %s184, 1
      %s186 = scalar_select %p183, %s184, %s185
      %p189 = pneg %p183
      %p190 = scmp.eq.s32.totalorder %s17, 1
      %p191 = por %p189, %p190
      %p192 = scmp.ne.s32.totalorder %s184, %s187
      %p193 = scmp.eq.s32.totalorder %s17, 0
      %p194 = por %p192, %p193
      %p195 = scmp.ne.s32.totalorder %s184, %s187
      %p196 = scmp.eq.s32.totalorder %s22, 1
      %p197 = por %p195, %p196
      %p198 = scmp.ne.s32.totalorder %s187, %s188
      %p199 = scmp.eq.s32.totalorder %s22, 0
      %p200 = por %p198, %p199
      %p201 = scmp.ne.s32.totalorder %s187, %s188
      %p202 = scmp.eq.s32.totalorder %s23, 1
      %p203 = por %p201, %p202
      %p205 = scmp.ne.s32.totalorder %s188, %s204
      %p206 = scmp.eq.s32.totalorder %s23, 0
      %p207 = por %p205, %p206
      %s208 = ssub.s32 %s24, %s36
      %p209 = scmp.eq.s32.totalorder %s208, 0
      %s211 = sadd.s32 %s210, 1
      %s212 = scalar_select %p209, %s210, %s211
      %p215 = pneg %p209
      %p216 = scmp.eq.s32.totalorder %s17, 1
      %p217 = por %p215, %p216
      %p218 = scmp.ne.s32.totalorder %s210, %s213
      %p219 = scmp.eq.s32.totalorder %s17, 0
      %p220 = por %p218, %p219
      %p221 = scmp.ne.s32.totalorder %s210, %s213
      %p222 = scmp.eq.s32.totalorder %s22, 1
      %p223 = por %p221, %p222
      %p224 = scmp.ne.s32.totalorder %s213, %s214
      %p225 = scmp.eq.s32.totalorder %s22, 0
      %p226 = por %p224, %p225
      %p227 = scmp.ne.s32.totalorder %s213, %s214
      %p228 = scmp.eq.s32.totalorder %s23, 1
      %p229 = por %p227, %p228
      %p231 = scmp.ne.s32.totalorder %s214, %s230
      %p232 = scmp.eq.s32.totalorder %s23, 0
      %p233 = por %p231, %p232
      %p234 = scmp.le.s32.totalorder 1, %s17
      %p235 = scmp.lt.s32.totalorder %s17, 3
      %p236 = pnand %p234, %p235
      %p237 = pneg %p236
      // Predicated region
      $region9: #{_lambda_.1} parent=5 // pred_check
        _
      $region10: #{_lambda_.1} parent=5 // pred_check_branch
        %239 = sbr.rel (%p236) target = $region12
      $region11: #{_lambda_.1} parent=5 // pred_region
        %s240 = ssub.s32 %s17, 1
        // Predicated region
        $region13: #{_lambda_.1} parent=11 // pred_check
          %p241 = pneg %p78
        $region14: #{_lambda_.1} parent=11 // pred_check_branch
          %243 = sbr.rel (%p241) target = $region16
        $region15: #{_lambda_.1} parent=11 // pred_region
          _
        $region16: #{_lambda_.1} parent=11 // pred_fallthru
          _
        // Predicated region
        $region17: #{_lambda_.1} parent=11 // pred_check
          %p244 = pneg %p99
        $region18: #{_lambda_.1} parent=11 // pred_check_branch
          %246 = sbr.rel (%p244) target = $region20
        $region19: #{_lambda_.1} parent=11 // pred_region
          _
        $region20: #{_lambda_.1} parent=11 // pred_fallthru
          _
        // Predicated region
        $region21: #{_lambda_.1} parent=11 // pred_check
          %p247 = pneg %p120
        $region22: #{_lambda_.1} parent=11 // pred_check_branch
          %249 = sbr.rel (%p247) target = $region24
        $region23: #{_lambda_.1} parent=11 // pred_region
          _
        $region24: #{_lambda_.1} parent=11 // pred_fallthru
          _
      $region12: #{_lambda_.1} parent=5 // pred_fallthru
        _
      %p250 = scmp.lt.s32.totalorder %s17, 2
      // Predicated region
      $region25: #{_lambda_.1} parent=5 // pred_check
        %p251 = pneg %p250
      $region26: #{_lambda_.1} parent=5 // pred_check_branch
        %253 = sbr.rel (%p251) target = $region28
      $region27: #{_lambda_.1} parent=5 // pred_region
        // Predicated region
        $region29: #{_lambda_.1} parent=27 // pred_check
          %p254 = pneg %p51
        $region30: #{_lambda_.1} parent=27 // pred_check_branch
          %256 = sbr.rel (%p254) target = $region32
        $region31: #{_lambda_.1} parent=27 // pred_region
          %s257 = smul.u32 2, %s25
          %p258 = scmp.lt.s32.totalorder %s24, 1
          %s259 = scalar_select %p258, %s24, 1
          %p260 = scmp.lt.s32.totalorder %s257, 1
          %s261 = scalar_select %p260, %s257, 1
          %s262 = smul.addr %s259, 2
          %s263 = sadd.s32 %s261, %s262
          %s264 = smul.addr %s263, 8
          %s265 = scalar_lea.vmem %s0, %s264
          %s266 = smul.u32 2, %s25
        $region32: #{_lambda_.1} parent=27 // pred_fallthru
          _
        // Predicated region
        $region33: #{_lambda_.1} parent=27 // pred_check
          %p267 = pneg %p140
        $region34: #{_lambda_.1} parent=27 // pred_check_branch
          %269 = sbr.rel (%p267) target = $region36
        $region35: #{_lambda_.1} parent=27 // pred_region
          %p270 = scmp.lt.s32.totalorder %s24, 1
          %s271 = scalar_select %p270, %s24, 1
          %s272 = scalar_lea.vmem %s4, %s271
        $region36: #{_lambda_.1} parent=27 // pred_fallthru
          _
      $region28: #{_lambda_.1} parent=5 // pred_fallthru
        _
      %p273 = scmp.le.s32.totalorder 1, %s17
      %p274 = scmp.lt.s32.totalorder %s17, 3
      %p275 = pnand %p273, %p274
      %p276 = pneg %p275
      // Predicated region
      $region37: #{_lambda_.1} parent=5 // pred_check
        _
      $region38: #{_lambda_.1} parent=5 // pred_check_branch
        %278 = sbr.rel (%p275) target = $region40
      $region39: #{_lambda_.1} parent=5 // pred_region
        %s279 = ssub.s32 %s17, 1
        %s280 = smul.u32 2, %s27
        %p281 = scmp.lt.s32.totalorder %s26, 1
        %s282 = scalar_select %p281, %s26, 1
        %p283 = scmp.lt.s32.totalorder %s280, 1
        %s284 = scalar_select %p283, %s280, 1
        %s285 = smul.addr %s282, 2
        %s286 = sadd.s32 %s284, %s285
        %s287 = smul.addr %s286, 8
        %s288 = scalar_lea.vmem %s0, %s287
        %p289 = pneg %p57
        %p290 = pneg %p54
        %p291 = pneg %p78
        %p292 = pneg %p75
        %p293 = pneg %p99
        %p294 = pneg %p96
        %p295 = pneg %p120
        %p296 = pneg %p117
        %p297 = scmp.lt.s32.totalorder %s26, 1
        %s298 = scalar_select %p297, %s26, 1
        %s299 = scalar_lea.vmem %s4, %s298
        %p300 = pneg %p146
        %p301 = pneg %p143
        %p302 = pneg %p174
        %p303 = pneg %p171
        %s304 = sand.u32 %s161, 1
        %s305 = scalar_lea.sflag [#allocation7], %s304
        %s306 = sand.u32 %s161, 1
        %s307 = smul.addr %s306, 8
        %s308 = scalar_lea.vmem [#allocation6], %s307
        %p309 = pneg %p200
        %p310 = pneg %p197
        %p311 = scmp.lt.s32.totalorder %s26, 1
        %s312 = scalar_select %p311, %s26, 1
        %s313 = scalar_lea.vmem %s6, %s312
        %p314 = pneg %p226
        %p315 = pneg %p223
        %p316 = scmp.lt.s32.totalorder %s26, 1
        %s317 = scalar_select %p316, %s26, 1
        %s318 = scalar_lea.vmem %s7, %s317
        %s319 = smul.u32 2, %s27
        %p320 = scmp.lt.s32.totalorder %s26, 1
        %s321 = scalar_select %p320, %s26, 1
        %p322 = scmp.lt.s32.totalorder %s319, 1
        %s323 = scalar_select %p322, %s319, 1
        %s324 = smul.addr %s321, 2
        %s325 = sadd.s32 %s323, %s324
        %s326 = smul.addr %s325, 8
        %s327 = scalar_lea.vmem %s0, %s326
        %s328 = smul.u32 2, %s27
        %p329 = scmp.lt.s32.totalorder %s26, 1
        %s330 = scalar_select %p329, %s26, 1
        %s331 = scalar_lea.vmem %s4, %s330
        %s332 = smul.u32 2, %s27
        %p333 = scmp.lt.s32.totalorder %s26, 1
        %s334 = scalar_select %p333, %s26, 1
        %s335 = scalar_lea.vmem %s6, %s334
        %p336 = scmp.lt.s32.totalorder %s26, 1
        %s337 = scalar_select %p336, %s26, 1
        %s338 = scalar_lea.vmem %s7, %s337
        %v339 = vld [vmem:[%s327] sm:$0xff]
        %v340 = vld [vmem:[%s327 + $0x8] sm:$0xff]
        %v341 = vld [vmem:[%s1] sm:$0x7f]
        %v342 = vlaneseq
        %v343 = vand.u32 %v342, 127
        %vm344 = vcmp.ge.s32.totalorder %v343, 30
        %v345 = vsel %vm344, 1.5707964, 0.0
        %vm346 = vcmask 56320
        %v348 = vsel %vm346, %v339, 0
        %v351 = vsel %vm346, %v340, 0
        %vm353 = vcmask 1046528
        %v355 = vsel %vm353, %v341, 0
        %357 = vmatprep.subr.mxu0 0.0
        %358 = vmatpush1.msra.mxu0 %v355
        %359 = vmatprep.subr.mxu0 0.0
        %360 = vmatpush1.msra.mxu0 0.0
        %361 = vmatprep.subr.mxu0 0.0
        %362 = vmatpush1.msra.mxu0 0.0
        %363 = vmatprep.subr.mxu0 0.0
        %364 = vmatpush1.msra.mxu0 0.0
        %365 = vmatprep.subr.mxu0 0.0
        %366 = vmatpush1.msra.mxu0 0.0
        %367 = vmatprep.subr.mxu0 0.0
        %368 = vmatpush1.msra.mxu0 0.0
        %369 = vmatprep.subr.mxu0 0.0
        %370 = vmatpush1.msra.mxu0 0.0
        %371 = vmatprep.subr.mxu0 0.0
        %372 = vmatpush1.msra.mxu0 0.0
        %373 = vmatprep.subr.mxu0 0.0
        %374 = vmatpush1.msra.mxu0 0.0
        %375 = vmatprep.subr.mxu0 0.0
        %376 = vmatpush1.msra.mxu0 0.0
        %377 = vmatprep.subr.mxu0 0.0
        %378 = vmatpush1.msra.mxu0 0.0
        %379 = vmatprep.subr.mxu0 0.0
        %380 = vmatpush1.msra.mxu0 0.0
        %381 = vmatprep.subr.mxu0 0.0
        %382 = vmatpush1.msra.mxu0 0.0
        %383 = vmatprep.subr.mxu0 0.0
        %384 = vmatpush1.msra.mxu0 0.0
        %385 = vmatprep.subr.mxu0 0.0
        %386 = vmatpush1.msra.mxu0 0.0
        %387 = vmatprep.subr.mxu0 0.0
        %388 = vmatpush1.msra.mxu0 0.0
        %389 = vmatprep.subr.mxu0 0.0
        %390 = vmatpush1.msra.mxu0 0.0
        %391 = vmatprep.subr.mxu0 0.0
        %392 = vmatpush1.msra.mxu0 0.0
        %393 = vmatprep.subr.mxu0 0.0
        %394 = vmatpush1.msra.mxu0 0.0
        %395 = vmatprep.subr.mxu0 0.0
        %396 = vmatpush1.msra.mxu0 0.0
        %397 = vmatprep.subr.mxu0 0.0
        %398 = vmatpush1.msra.mxu0 0.0
        %399 = vmatprep.subr.mxu0 0.0
        %400 = vmatpush1.msra.mxu0 0.0
        %401 = vmatprep.subr.mxu0 0.0
        %402 = vmatpush1.msra.mxu0 0.0
        %403 = vmatprep.subr.mxu0 0.0
        %404 = vmatpush1.msra.mxu0 0.0
        %405 = vmatprep.subr.mxu0 0.0
        %406 = vmatpush1.msra.mxu0 0.0
        %407 = vmatprep.subr.mxu0 0.0
        %408 = vmatpush1.msra.mxu0 0.0
        %409 = vmatprep.subr.mxu0 0.0
        %410 = vmatpush1.msra.mxu0 0.0
        %411 = vmatprep.subr.mxu0 0.0
        %412 = vmatpush1.msra.mxu0 0.0
        %413 = vmatprep.subr.mxu0 0.0
        %414 = vmatpush1.msra.mxu0 0.0
        %415 = vmatprep.subr.mxu0 0.0
        %416 = vmatpush1.msra.mxu0 0.0
        %417 = vmatprep.subr.mxu0 0.0
        %418 = vmatpush1.msra.mxu0 0.0
        %419 = vmatprep.subr.mxu0 0.0
        %420 = vmatpush1.msra.mxu0 0.0
        %421 = vmatprep.mubr.f32.mxu0 0.0
        %422 = vmatmul.mubr.f32.gmra.mrb[0].mxu0 %v348
        %v423 = vpop.f32.mrb[0].mxu0
        %v424 = vadd.f32 %v345, %v423
        %v425 = vpop.f32.mrb[0].mxu0
        %426 = vmatprep.mubr.f32.mxu0 0.0
        %427 = vmatmul.mubr.f32.gmra.mrb[0].mxu0 %v351
        %v428 = vpop.f32.mrb[0].mxu0
        %v429 = vadd.f32 %v345, %v428
        %v430 = vpop.f32.mrb[0].mxu0
        %431 = vdwg.mxu0
        %v432 = vand.u32 2147483647, %v424
        %vm433 = vcmp.le.f32.partialorder %v432, 0.7853982
        %vm434 = vcmp.lt.s32.totalorder %v424, 0
        %v435 = vand.u32 %v424, 2139095040
        %v436 = vshrl.u32 %v435, 23
        %v437 = vsub.s32 %v436, 127
        %v438 = vand.u32 2147483647, %v424
        %v439 = vand.u32 %v438, 8388607
        %v440 = vor.u32 %v439, 8388608
        %v441 = vsub.s32 0, %v440
        %v442 = vadd.s32 %v437, 1
        %vm443 = vcmp.gt.s32.totalorder %v442, 0
        %v444 = vsel %vm443, %v442, 0
        %v445 = vshrl.u32 %v444, 5
        %v446 = vand.u32 %v444, 31
        %v447 = vsub.s32 32, %v446
        %v448 = vshrl.u32 683565275, %v447
        %v449 = vshll.u32 683565275, %v446
        %v450 = vshrl.u32 2475754826, %v447
        %v451 = vor.u32 %v449, %v450
        %v452 = vshll.u32 2475754826, %v446
        %v453 = vshrl.u32 2131351028, %v447
        %v454 = vor.u32 %v452, %v453
        %v455 = vshll.u32 2131351028, %v446
        %v456 = vshrl.u32 2102212464, %v447
        %v457 = vor.u32 %v455, %v456
        %v458 = vshll.u32 2102212464, %v446
        %v459 = vshrl.u32 920167782, %v447
        %v460 = vor.u32 %v458, %v459
        %v461 = vshll.u32 920167782, %v446
        %v462 = vshrl.u32 1326507024, %v447
        %v463 = vor.u32 %v461, %v462
        %vm464 = vcmp.lt.s32.totalorder %v445, 1
        %vm465 = vcmp.lt.s32.totalorder %v445, 2
        %vm466 = vcmp.lt.s32.totalorder %v445, 3
        %vm467 = vcmp.lt.s32.totalorder %v445, 4
        %v468 = vsel %vm464, %v448, %v451
        %v469 = vsel %vm467, %v457, 2102212464
        %v470 = vsel %vm466, %v454, %v469
        %v471 = vsel %vm465, %v468, %v470
        %v472 = vsel %vm464, %v451, %v454
        %v473 = vsel %vm467, %v460, 920167782
        %v474 = vsel %vm466, %v457, %v473
        %v475 = vsel %vm465, %v472, %v474
        %v476 = vsel %vm464, %v454, %v457
        %v477 = vsel %vm467, %v463, 1326507024
        %v478 = vsel %vm466, %v460, %v477
        %v479 = vsel %vm465, %v476, %v478
        %v480 = vshll.u32 %v440, 8
        %v481 = vmul.u32.u64.compose %v480, %v479
        %v482 = vextract.low.u32 %v481
        %v483 = vextract.high.u32 %v481
        %v484 = vmul.u32.u64.compose %v480, %v475
        %v485 = vextract.low.u32 %v484
        %v486 = vextract.high.u32 %v484
        %v487 = vmul.u32 %v480, %v471
        %v488 = vadd.s32 %v483, %v485
        %vm489 = vc.u32 %v483, %v485
        %v490 = vadd.s32 %v486, 1
        %v491 = vsel %vm489, %v490, %v486
        %v492 = vadd.s32 %v487, %v491
        %v493 = vadd.s32 %v492, 536870912
        %v494 = vshrl.u32 %v493, 30
        %v495 = vshll.u32 %v494, 30
        %v496 = vsub.s32 %v492, %v495
        %vm497 = vcmp.lt.s32.totalorder %v496, 0
        %v498 = vsub.s32 0, %v496
        %v499 = vsel %vm497, %v498, %v496
        %v500 = vclz %v499
        %v501 = vsub.s32 %v500, 2
        %vm502 = vcmp.gt.s32.totalorder 0, %v501
        %v503 = vsel %vm502, 0, %v501
        %v504 = vsub.s32 32, %v503
        %v505 = vshll.u32 %v496, %v503
        %v506 = vshrl.u32 %v488, %v504
        %v507 = vor.u32 %v505, %v506
        %v508 = vsub.s32 4294967266, %v503
        %v509 = vadd.s32 %v508, 127
        %v510 = vshll.u32 %v509, 23
        %v511 = vor.u32 4788187, %v510
        %v512 = vand.u32 2147483647, %v511
        %v514 = vcvt.s32.f32 %v507
        %v515 = vmul.f32 %v514, %v512
        %v516 = vxor.u32 %v515, 2147483648
        %v517 = vsel %vm434, %v516, %v515
        %v518 = vsub.s32 4, %v494
        %v519 = vsel %vm434, %v518, %v494
        %v520 = vsel %vm433, %v424, %v517
        %v521 = vsel %vm433, 0, %v519
        %v522 = vcosq.f32.pop %v520
        %v523 = vsinq.f32.pop %v520
        %vm524 = vweird.f32 %v424
        %v525 = vadd.s32 %v521, 3
        %v526 = vand.u32 %v525, 3
        %vm527 = vcmp.lt.s32.totalorder %v526, 2
        %vm528 = vcmp.eq.s32.totalorder %v526, 0
        %v529 = vxor.u32 %v523, 2147483648
        %v530 = vsel %vm528, %v522, %v529
        %vm531 = vcmp.eq.s32.totalorder %v526, 2
        %v532 = vxor.u32 %v522, 2147483648
        %v533 = vsel %vm531, %v532, %v523
        %v534 = vsel %vm527, %v530, %v533
        %v535 = vsel %vm524, nan, %v534
        %v536 = vand.u32 2147483647, %v429
        %vm537 = vcmp.le.f32.partialorder %v536, 0.7853982
        %vm538 = vcmp.lt.s32.totalorder %v429, 0
        %v539 = vand.u32 %v429, 2139095040
        %v540 = vshrl.u32 %v539, 23
        %v541 = vsub.s32 %v540, 127
        %v542 = vand.u32 2147483647, %v429
        %v543 = vand.u32 %v542, 8388607
        %v544 = vor.u32 %v543, 8388608
        %v545 = vsub.s32 0, %v544
        %v546 = vadd.s32 %v541, 1
        %vm547 = vcmp.gt.s32.totalorder %v546, 0
        %v548 = vsel %vm547, %v546, 0
        %v549 = vshrl.u32 %v548, 5
        %v550 = vand.u32 %v548, 31
        %v551 = vsub.s32 32, %v550
        %v552 = vshrl.u32 683565275, %v551
        %v553 = vshll.u32 683565275, %v550
        %v554 = vshrl.u32 2475754826, %v551
        %v555 = vor.u32 %v553, %v554
        %v556 = vshll.u32 2475754826, %v550
        %v557 = vshrl.u32 2131351028, %v551
        %v558 = vor.u32 %v556, %v557
        %v559 = vshll.u32 2131351028, %v550
        %v560 = vshrl.u32 2102212464, %v551
        %v561 = vor.u32 %v559, %v560
        %v562 = vshll.u32 2102212464, %v550
        %v563 = vshrl.u32 920167782, %v551
        %v564 = vor.u32 %v562, %v563
        %v565 = vshll.u32 920167782, %v550
        %v566 = vshrl.u32 1326507024, %v551
        %v567 = vor.u32 %v565, %v566
        %vm568 = vcmp.lt.s32.totalorder %v549, 1
        %vm569 = vcmp.lt.s32.totalorder %v549, 2
        %vm570 = vcmp.lt.s32.totalorder %v549, 3
        %vm571 = vcmp.lt.s32.totalorder %v549, 4
        %v572 = vsel %vm568, %v552, %v555
        %v573 = vsel %vm571, %v561, 2102212464
        %v574 = vsel %vm570, %v558, %v573
        %v575 = vsel %vm569, %v572, %v574
        %v576 = vsel %vm568, %v555, %v558
        %v577 = vsel %vm571, %v564, 920167782
        %v578 = vsel %vm570, %v561, %v577
        %v579 = vsel %vm569, %v576, %v578
        %v580 = vsel %vm568, %v558, %v561
        %v581 = vsel %vm571, %v567, 1326507024
        %v582 = vsel %vm570, %v564, %v581
        %v583 = vsel %vm569, %v580, %v582
        %v584 = vshll.u32 %v544, 8
        %v585 = vmul.u32.u64.compose %v584, %v583
        %v586 = vextract.low.u32 %v585
        %v587 = vextract.high.u32 %v585
        %v588 = vmul.u32.u64.compose %v584, %v579
        %v589 = vextract.low.u32 %v588
        %v590 = vextract.high.u32 %v588
        %v591 = vmul.u32 %v584, %v575
        %v592 = vadd.s32 %v587, %v589
        %vm593 = vc.u32 %v587, %v589
        %v594 = vadd.s32 %v590, 1
        %v595 = vsel %vm593, %v594, %v590
        %v596 = vadd.s32 %v591, %v595
        %v597 = vadd.s32 %v596, 536870912
        %v598 = vshrl.u32 %v597, 30
        %v599 = vshll.u32 %v598, 30
        %v600 = vsub.s32 %v596, %v599
        %vm601 = vcmp.lt.s32.totalorder %v600, 0
        %v602 = vsub.s32 0, %v600
        %v603 = vsel %vm601, %v602, %v600
        %v604 = vclz %v603
        %v605 = vsub.s32 %v604, 2
        %vm606 = vcmp.gt.s32.totalorder 0, %v605
        %v607 = vsel %vm606, 0, %v605
        %v608 = vsub.s32 32, %v607
        %v609 = vshll.u32 %v600, %v607
        %v610 = vshrl.u32 %v592, %v608
        %v611 = vor.u32 %v609, %v610
        %v612 = vsub.s32 4294967266, %v607
        %v613 = vadd.s32 %v612, 127
        %v614 = vshll.u32 %v613, 23
        %v615 = vor.u32 4788187, %v614
        %v616 = vand.u32 2147483647, %v615
        %v618 = vcvt.s32.f32 %v611
        %v619 = vmul.f32 %v618, %v616
        %v620 = vxor.u32 %v619, 2147483648
        %v621 = vsel %vm538, %v620, %v619
        %v622 = vsub.s32 4, %v598
        %v623 = vsel %vm538, %v622, %v598
        %v624 = vsel %vm537, %v429, %v621
        %v625 = vsel %vm537, 0, %v623
        %v626 = vcosq.f32.pop %v624
        %v627 = vsinq.f32.pop %v624
        %vm628 = vweird.f32 %v429
        %v629 = vadd.s32 %v625, 3
        %v630 = vand.u32 %v629, 3
        %vm631 = vcmp.lt.s32.totalorder %v630, 2
        %vm632 = vcmp.eq.s32.totalorder %v630, 0
        %v633 = vxor.u32 %v627, 2147483648
        %v634 = vsel %vm632, %v626, %v633
        %vm635 = vcmp.eq.s32.totalorder %v630, 2
        %v636 = vxor.u32 %v626, 2147483648
        %v637 = vsel %vm635, %v636, %v627
        %v638 = vsel %vm631, %v634, %v637
        %v639 = vsel %vm628, nan, %v638
        %v640 = vld [vmem:[%s2] sm:$0x7f]
        %v641 = vld [vmem:[%s3] sm:$0xff]
        %v642 = vld [vmem:[%s3 + $0x8] sm:$0xff]
        %v643 = vld [vmem:[%s3 + $0x10] sm:$0xff]
        %v644 = vld [vmem:[%s3 + $0x18] sm:$0xff]
        %v645 = vld [vmem:[%s3 + $0x20] sm:$0xff]
        %v646 = vld [vmem:[%s3 + $0x28] sm:$0xff]
        %v647 = vld [vmem:[%s3 + $0x30] sm:$0xff]
        %v648 = vld [vmem:[%s3 + $0x38] sm:$0xf]
        %vm649 = vcmask 490496
        %v651 = vsel %vm649, %v535, 0
        %v654 = vsel %vm649, %v639, 0
        %vm656 = vcmask 1043456
        %v658 = vsel %vm656, %v648, 0
        %660 = vmatprep.subr.mxu0 0.0
        %661 = vmatpush1.msra.mxu0 %v641
        %662 = vmatprep.subr.mxu0 0.0
        %663 = vmatpush1.msra.mxu0 %v642
        %664 = vmatprep.subr.mxu0 0.0
        %665 = vmatpush1.msra.mxu0 %v643
        %666 = vmatprep.subr.mxu0 0.0
        %667 = vmatpush1.msra.mxu0 %v644
        %668 = vmatprep.subr.mxu0 0.0
        %669 = vmatpush1.msra.mxu0 %v645
        %670 = vmatprep.subr.mxu0 0.0
        %671 = vmatpush1.msra.mxu0 %v646
        %672 = vmatprep.subr.mxu0 0.0
        %673 = vmatpush1.msra.mxu0 %v647
        %674 = vmatprep.subr.mxu0 0.0
        %675 = vmatpush1.msra.mxu0 %v658
        %676 = vmatprep.subr.mxu0 0.0
        %677 = vmatpush1.msra.mxu0 0.0
        %678 = vmatprep.subr.mxu0 0.0
        %679 = vmatpush1.msra.mxu0 0.0
        %680 = vmatprep.subr.mxu0 0.0
        %681 = vmatpush1.msra.mxu0 0.0
        %682 = vmatprep.subr.mxu0 0.0
        %683 = vmatpush1.msra.mxu0 0.0
        %684 = vmatprep.subr.mxu0 0.0
        %685 = vmatpush1.msra.mxu0 0.0
        %686 = vmatprep.subr.mxu0 0.0
        %687 = vmatpush1.msra.mxu0 0.0
        %688 = vmatprep.subr.mxu0 0.0
        %689 = vmatpush1.msra.mxu0 0.0
        %690 = vmatprep.subr.mxu0 0.0
        %691 = vmatpush1.msra.mxu0 0.0
        %692 = vmatprep.subr.mxu0 0.0
        %693 = vmatpush1.msra.mxu0 0.0
        %694 = vmatprep.subr.mxu0 0.0
        %695 = vmatpush1.msra.mxu0 0.0
        %696 = vmatprep.subr.mxu0 0.0
        %697 = vmatpush1.msra.mxu0 0.0
        %698 = vmatprep.subr.mxu0 0.0
        %699 = vmatpush1.msra.mxu0 0.0
        %700 = vmatprep.subr.mxu0 0.0
        %701 = vmatpush1.msra.mxu0 0.0
        %702 = vmatprep.subr.mxu0 0.0
        %703 = vmatpush1.msra.mxu0 0.0
        %704 = vmatprep.subr.mxu0 0.0
        %705 = vmatpush1.msra.mxu0 0.0
        %706 = vmatprep.subr.mxu0 0.0
        %707 = vmatpush1.msra.mxu0 0.0
        %708 = vmatprep.subr.mxu0 0.0
        %709 = vmatpush1.msra.mxu0 0.0
        %710 = vmatprep.subr.mxu0 0.0
        %711 = vmatpush1.msra.mxu0 0.0
        %712 = vmatprep.subr.mxu0 0.0
        %713 = vmatpush1.msra.mxu0 0.0
        %714 = vmatprep.subr.mxu0 0.0
        %715 = vmatpush1.msra.mxu0 0.0
        %716 = vmatprep.subr.mxu0 0.0
        %717 = vmatpush1.msra.mxu0 0.0
        %718 = vmatprep.subr.mxu0 0.0
        %719 = vmatpush1.msra.mxu0 0.0
        %720 = vmatprep.subr.mxu0 0.0
        %721 = vmatpush1.msra.mxu0 0.0
        %722 = vmatprep.subr.mxu0 0.0
        %723 = vmatpush1.msra.mxu0 0.0
        %724 = vmatprep.mubr.f32.mxu0 0.0
        %725 = vmatmul.mubr.f32.gmra.mrb[0].mxu0 %v651
        %v726 = vpop.f32.mrb[0].mxu0
        %v727 = vadd.f32 0.0, %v726
        %v728 = vpop.f32.mrb[0].mxu0
        %729 = vmatprep.mubr.f32.mxu0 0.0
        %730 = vmatmul.mubr.f32.gmra.mrb[0].mxu0 %v654
        %v731 = vpop.f32.mrb[0].mxu0
        %v732 = vadd.f32 0.0, %v731
        %v733 = vpop.f32.mrb[0].mxu0
        %734 = vdwg.mxu0
        %v736 = vsel %vm353, %v640, 0
        %738 = vmatprep.subr.mxu0 0.0
        %739 = vmatpush1.msra.mxu0 %v736
        %740 = vmatprep.subr.mxu0 0.0
        %741 = vmatpush1.msra.mxu0 0.0
        %742 = vmatprep.subr.mxu0 0.0
        %743 = vmatpush1.msra.mxu0 0.0
        %744 = vmatprep.subr.mxu0 0.0
        %745 = vmatpush1.msra.mxu0 0.0
        %746 = vmatprep.subr.mxu0 0.0
        %747 = vmatpush1.msra.mxu0 0.0
        %748 = vmatprep.subr.mxu0 0.0
        %749 = vmatpush1.msra.mxu0 0.0
        %750 = vmatprep.subr.mxu0 0.0
        %751 = vmatpush1.msra.mxu0 0.0
        %752 = vmatprep.subr.mxu0 0.0
        %753 = vmatpush1.msra.mxu0 0.0
        %754 = vmatprep.subr.mxu0 0.0
        %755 = vmatpush1.msra.mxu0 0.0
        %756 = vmatprep.subr.mxu0 0.0
        %757 = vmatpush1.msra.mxu0 0.0
        %758 = vmatprep.subr.mxu0 0.0
        %759 = vmatpush1.msra.mxu0 0.0
        %760 = vmatprep.subr.mxu0 0.0
        %761 = vmatpush1.msra.mxu0 0.0
        %762 = vmatprep.subr.mxu0 0.0
        %763 = vmatpush1.msra.mxu0 0.0
        %764 = vmatprep.subr.mxu0 0.0
        %765 = vmatpush1.msra.mxu0 0.0
        %766 = vmatprep.subr.mxu0 0.0
        %767 = vmatpush1.msra.mxu0 0.0
        %768 = vmatprep.subr.mxu0 0.0
        %769 = vmatpush1.msra.mxu0 0.0
        %770 = vmatprep.subr.mxu0 0.0
        %771 = vmatpush1.msra.mxu0 0.0
        %772 = vmatprep.subr.mxu0 0.0
        %773 = vmatpush1.msra.mxu0 0.0
        %774 = vmatprep.subr.mxu0 0.0
        %775 = vmatpush1.msra.mxu0 0.0
        %776 = vmatprep.subr.mxu0 0.0
        %777 = vmatpush1.msra.mxu0 0.0
        %778 = vmatprep.subr.mxu0 0.0
        %779 = vmatpush1.msra.mxu0 0.0
        %780 = vmatprep.subr.mxu0 0.0
        %781 = vmatpush1.msra.mxu0 0.0
        %782 = vmatprep.subr.mxu0 0.0
        %783 = vmatpush1.msra.mxu0 0.0
        %784 = vmatprep.subr.mxu0 0.0
        %785 = vmatpush1.msra.mxu0 0.0
        %786 = vmatprep.subr.mxu0 0.0
        %787 = vmatpush1.msra.mxu0 0.0
        %788 = vmatprep.subr.mxu0 0.0
        %789 = vmatpush1.msra.mxu0 0.0
        %790 = vmatprep.subr.mxu0 0.0
        %791 = vmatpush1.msra.mxu0 0.0
        %792 = vmatprep.subr.mxu0 0.0
        %793 = vmatpush1.msra.mxu0 0.0
        %794 = vmatprep.subr.mxu0 0.0
        %795 = vmatpush1.msra.mxu0 0.0
        %796 = vmatprep.subr.mxu0 0.0
        %797 = vmatpush1.msra.mxu0 0.0
        %798 = vmatprep.subr.mxu0 0.0
        %799 = vmatpush1.msra.mxu0 0.0
        %800 = vmatprep.subr.mxu0 0.0
        %801 = vmatpush1.msra.mxu0 0.0
        %802 = vmatprep.mubr.f32.mxu0 0.0
        %803 = vmatmul.mubr.f32.gmra.mrb[0].mxu0 %v348
        %v804 = vpop.f32.mrb[0].mxu0
        %v805 = vadd.f32 %v727, %v804
        %v806 = vpop.f32.mrb[0].mxu0
        %807 = vmatprep.mubr.f32.mxu0 0.0
        %808 = vmatmul.mubr.f32.gmra.mrb[0].mxu0 %v351
        %v809 = vpop.f32.mrb[0].mxu0
        %v810 = vadd.f32 %v732, %v809
        %v811 = vpop.f32.mrb[0].mxu0
        %812 = vdwg.mxu0
        %v813 = vld [vmem:[%s331] sm:$0x1]
        %v815 = vlaneseq
        %v816 = vshrl.u32 %v815, 7
        %v817 = vsub.s32 0, %v816
        %v818 = vrot.slane %v813, %v817
        %v820 = vadd.f32 %v805, %v818
        %v821 = vadd.f32 %v810, %v818
        %v822 = vpack.c.bf16 %v821, %v820
        %v824 = vunpack.c.l.b16 %v822
        %v825 = vunpack.c.h.b16 %v822
        %v826 = vpack.c.b16 %v824, %v824
        %v827 = vpack.c.b16 %v825, %v825
        %830 = vst [vmem:[%s308] sm:$0xf] %v826
        %831 = vst [vmem:[%s308 + $0x4] sm:$0xf] %v827
        %p832 = scmp.eq.s32.totalorder %s27, 0
        // Predicated region
        $region41: #{_lambda_.1} parent=39 // pred_check
          %p833 = pneg %p832
        $region42: #{_lambda_.1} parent=39 // pred_check_branch
          %835 = sbr.rel (%p833) target = $region44
        $region43: #{_lambda_.1} parent=39 // pred_region
          %836 = vst [vmem:[#allocation2] sm:$0x1] -inf
          %837 = vst [vmem:[#allocation3] sm:$0x1] 0.0
          %838 = vst [vmem:[#allocation4] sm:$0x1] 0.0
          %839 = vst [vmem:[#allocation5] sm:$0x1] %v820
        $region44: #{_lambda_.1} parent=39 // pred_fallthru
          _
        %v840 = vld [vmem:[#allocation5] sm:$0x1]
        %v842 = vlaneseq
        %v843 = vshrl.u32 %v842, 7
        %v844 = vsub.s32 0, %v843
        %v845 = vrot.slane %v840, %v844
        %v847 = vsub.f32 %v820, %v845
        %v848 = vsub.f32 %v821, %v845
        %v849 = vld [vmem:[#allocation2] sm:$0x1]
        %v850 = vmax.f32 %v820, %v821
        %v851 = vrot.slane %v850, 4
        %v852 = vmax.f32 %v850, %v851
        %v853 = vrot.slane %v852, 2
        %v854 = vmax.f32 %v852, %v853
        %v855 = vrot.slane %v854, 1
        %v856 = vmax.f32 %v854, %v855
        %v857 = vmax.f32 %v849, %v856
        %858 = vst [vmem:[#allocation2] sm:$0x1] %v857
        %v859 = vld [vmem:[#allocation3] sm:$0x1]
        %v860 = vadd.f32 %v847, %v848
        %v861 = vrot.slane %v860, 4
        %v862 = vadd.f32 %v860, %v861
        %v863 = vrot.slane %v862, 2
        %v864 = vadd.f32 %v862, %v863
        %v865 = vrot.slane %v864, 1
        %v866 = vadd.f32 %v864, %v865
        %v867 = vadd.f32 %v859, %v866
        %868 = vst [vmem:[#allocation3] sm:$0x1] %v867
        %v869 = vld [vmem:[#allocation4] sm:$0x1]
        %v870 = vmul.f32 %v847, %v847
        %v871 = vmul.f32 %v848, %v848
        %v872 = vadd.f32 %v870, %v871
        %v873 = vrot.slane %v872, 4
        %v874 = vadd.f32 %v872, %v873
        %v875 = vrot.slane %v874, 2
        %v876 = vadd.f32 %v874, %v875
        %v877 = vrot.slane %v876, 1
        %v878 = vadd.f32 %v876, %v877
        %v879 = vadd.f32 %v869, %v878
        %880 = vst [vmem:[#allocation4] sm:$0x1] %v879
        // Predicated region
        $region45: #{_lambda_.1} parent=39 // pred_check
          %p881 = pneg %p832
        $region46: #{_lambda_.1} parent=39 // pred_check_branch
          %883 = sbr.rel (%p881) target = $region48
        $region47: #{_lambda_.1} parent=39 // pred_region
          %v884 = vld [vmem:[#allocation2] sm:$0x1]
          %885 = vst [vmem:[%s335] sm:$0x1] %v884
          %v886 = vld [vmem:[#allocation3] sm:$0x1]
          %v887 = vld [vmem:[#allocation4] sm:$0x1]
          %v888 = vmul.f32 %v886, %v886
          %v889 = vmul.f32 %v888, 0.0625
          %v890 = vsub.f32 %v887, %v889
          %v891 = vmul.f32 %v890, 0.06666667
          %v892 = vmax.f32 %v891, 0.0
          %v893 = vrsqrt.pop %v892
          %v894 = vmul.f32 %v892, %v893
          %vm895 = vcmp.eq.f32.partialorder %v892, inf
          %v896 = vsel %vm895, %v892, %v894
          %vm897 = vcmp.eq.f32.partialorder %v892, 0.0
          %v898 = vand.u32 %v892, 2147483648
          %v899 = vsel %vm897, %v898, %v896
          %900 = vst [vmem:[%s338] sm:$0x1] %v899
        $region48: #{_lambda_.1} parent=39 // pred_fallthru
          _
        %s901 = sand.u32 %s161, 1
        %s902 = scalar_lea.sflag [#allocation7], %s901
        %s903 = sand.u32 %s161, 1
        %s904 = smul.addr %s903, 8
        %s905 = scalar_lea.vmem [#allocation6], %s904
        %p906 = scmp.lt.s32.totalorder %s26, 1
        %s907 = scalar_select %p906, %s26, 1
        %s908 = scalar_lea.vmem %s6, %s907
        %p909 = scmp.lt.s32.totalorder %s26, 1
        %s910 = scalar_select %p909, %s26, 1
        %s911 = scalar_lea.vmem %s7, %s910
        // Predicated region
        $region49: #{_lambda_.1} parent=39 // pred_check
          %p912 = pneg %p171
        $region50: #{_lambda_.1} parent=39 // pred_check_branch
          %914 = sbr.rel (%p912) target = $region52
        $region51: #{_lambda_.1} parent=39 // pred_region
          %s915 = smul.u32 2, %s27
          %s917 = ssub.s32 128, 128
          %918 = vsyncadd %s902, %s917
          %s919 = smul.addr %s26, 2
          %s920 = sadd.s32 %s915, %s919
          %s921 = smul.addr %s920, 64
          %s922 = scalar_lea.hbm %s5, %s921
          %s923 = sshll.u32 %s905, 4
          %s924 = int_to_ptr.vmem [resolvable:$true] %s923
          %929 = dma.vmem_to_hbm [thread:$0]  %s924, 128, %s922, %s902, 64, 64, 4
        $region52: #{_lambda_.1} parent=39 // pred_fallthru
          _
        // Predicated region
        $region53: #{_lambda_.1} parent=39 // pred_check
          %p930 = pneg %p197
        $region54: #{_lambda_.1} parent=39 // pred_check_branch
          %932 = sbr.rel (%p930) target = $region56
        $region55: #{_lambda_.1} parent=39 // pred_region
          _
        $region56: #{_lambda_.1} parent=39 // pred_fallthru
          _
        // Predicated region
        $region57: #{_lambda_.1} parent=39 // pred_check
          %p933 = pneg %p223
        $region58: #{_lambda_.1} parent=39 // pred_check_branch
          %935 = sbr.rel (%p933) target = $region60
        $region59: #{_lambda_.1} parent=39 // pred_region
          _
        $region60: #{_lambda_.1} parent=39 // pred_fallthru
          _
      $region40: #{_lambda_.1} parent=5 // pred_fallthru
        _
      %p936 = scmp.le.s32.totalorder 2, %s17
      // Predicated region
      $region61: #{_lambda_.1} parent=5 // pred_check
        %p937 = pneg %p936
      $region62: #{_lambda_.1} parent=5 // pred_check_branch
        %939 = sbr.rel (%p937) target = $region64
      $region63: #{_lambda_.1} parent=5 // pred_region
        %s940 = ssub.s32 %s17, 2
        // Predicated region
        $region65: #{_lambda_.1} parent=63 // pred_check
          %p941 = pneg %p177
        $region66: #{_lambda_.1} parent=63 // pred_check_branch
          %943 = sbr.rel (%p941) target = $region68
        $region67: #{_lambda_.1} parent=63 // pred_region
          %s944 = sand.u32 %s162, 1
          %s945 = scalar_lea.sflag [#allocation7], %s944
          %s946 = sand.u32 %s162, 1
          %s947 = smul.addr %s946, 8
          %s948 = scalar_lea.vmem [#allocation6], %s947
          %949 = dma.done %s945, 128
        $region68: #{_lambda_.1} parent=63 // pred_fallthru
          _
        // Predicated region
        $region69: #{_lambda_.1} parent=63 // pred_check
          %p950 = pneg %p203
        $region70: #{_lambda_.1} parent=63 // pred_check_branch
          %952 = sbr.rel (%p950) target = $region72
        $region71: #{_lambda_.1} parent=63 // pred_region
          %p953 = scmp.lt.s32.totalorder %s28, 1
          %s954 = scalar_select %p953, %s28, 1
          %s955 = scalar_lea.vmem %s6, %s954
        $region72: #{_lambda_.1} parent=63 // pred_fallthru
          _
        // Predicated region
        $region73: #{_lambda_.1} parent=63 // pred_check
          %p956 = pneg %p229
        $region74: #{_lambda_.1} parent=63 // pred_check_branch
          %958 = sbr.rel (%p956) target = $region76
        $region75: #{_lambda_.1} parent=63 // pred_region
          %p959 = scmp.lt.s32.totalorder %s28, 1
          %s960 = scalar_select %p959, %s28, 1
          %s961 = scalar_lea.vmem %s7, %s960
        $region76: #{_lambda_.1} parent=63 // pred_fallthru
          _
      $region64: #{_lambda_.1} parent=5 // pred_fallthru
        _
    $region6: #{_lambda_.1} parent=1 // loop_footer
      %s21 = sadd.s32 1, %s17
    $region7: #{_lambda_.1} parent=1 // loop_footer_branch
      %16 = sbr.rel target = $region3
    $region8: #{_lambda_.1} parent=1 // loop_exit
      _
    %962 = vsyncpa [#allocation7], 1
    %s963 = scalar_lea.sflag [#allocation7], 1
    %964 = vsyncpa %s963, 1

</llo_original>
